<compile_context>
chip_gen: v7x
topology: tpu7x:2x2x1
jax: 0.10.0
libtpu: 0.0.40
codegen_flags: <defaults>
</compile_context>

<pallas_src>
import functools

import jax
import jax.numpy as jnp
from jax.experimental import pallas as pl
from jax.experimental.pallas import tpu as pltpu

_LANES = 128
_SUBLANES = 8
# Conservative tile budget: leaves headroom on v7x (64 MiB physical VMEM) and
# is far under v5e/v6e's 128 MiB.
_VMEM_TILE_BUDGET = 40 * 1024 * 1024


def _round_up(x, m):
    return ((x + m - 1) // m) * m


def _round_down(x, m):
    return (x // m) * m


def _pick_tile(rows, requested, per_row_bytes, resident_bytes):
    """Largest legal batch tile under the VMEM budget (mult of 8 or full dim)."""
    budget_rows = max(_SUBLANES, (_VMEM_TILE_BUDGET - resident_bytes) // per_row_bytes)
    tile = min(max(_SUBLANES, requested), budget_rows)
    if rows <= tile:
        return rows                       # single block == full dim (always legal)
    return max(_SUBLANES, _round_down(tile, _SUBLANES))


def _vmem_limit(per_row_bytes, resident_bytes, tile_rows):
    need = resident_bytes + per_row_bytes * tile_rows
    return int(min(48 * 1024 * 1024, max(16 * 1024 * 1024, int(1.5 * need))))


def _packed_kernel(xp_ref, wbd_ref, b_ref, g_ref, o_ref, *, exact_div):
    # xp_ref:(TBP, P*E)  wbd_ref:(P*E, P*A)  b_ref:(1, P*A)  g_ref:(P*A, P*A)
    # o_ref:(TBP, P*A) -- P*A == 128 lanes -> fully lane-dense stores.
    logits = jnp.dot(xp_ref[...], wbd_ref[...],
                     preferred_element_type=jnp.float32) + b_ref[...]
    # Per-packed-row max: constant within every A-lane group, so it cancels
    # exactly in the group softmax below.
    m = jnp.max(logits, axis=-1, keepdims=True)
    e = jnp.exp(logits - m)
    # Group sums broadcast across each A-lane group via block-diag ones (MXU).
    denom = jnp.dot(e, g_ref[...], preferred_element_type=jnp.float32)
    denom = jnp.maximum(denom, 1e-30)     # guard pathological full-group underflow
    if exact_div:
        probs = e / denom
    else:
        probs = e * pl.reciprocal(denom, approx=True)
    o_ref[...] = probs.astype(o_ref.dtype)


def _rowwise_kernel(x_ref, w_ref, b_ref, o_ref, *, exact_div):
    # x_ref:(TB, E)  w_ref:(E, A)  b_ref:(1, A)  o_ref:(TB, A)
    logits = jnp.dot(x_ref[...], w_ref[...],
                     preferred_element_type=jnp.float32) + b_ref[...]
    m = jnp.max(logits, axis=-1, keepdims=True)
    e = jnp.exp(logits - m)
    denom = jnp.sum(e, axis=-1, keepdims=True)
    if exact_div:
        probs = e / denom
    else:
        probs = e * pl.reciprocal(denom, approx=True)
    o_ref[...] = probs.astype(o_ref.dtype)


def _pack_factor(B, E, A):
    """Rows packed per 128-lane output row (1 => row-wise fallback)."""
    if A >= _LANES or _LANES % A != 0:
        return 1
    p = _LANES // A
    if B % p != 0 or p * E > 1024:
        return 1
    return p


def _forward_packed(x, w, b_row, *, pack, block_b, exact_div):
    B, E = x.shape
    A = w.shape[1]
    EP, AP = pack * E, pack * A            # 256, 128 at the module's shapes
    BP = B // pack

    # Free, contiguous reshape: packed row i holds logical rows pack*i .. pack*i+pack-1.
    xp = x.reshape(BP, EP)

    # Block-diagonal replicated weight: lanes [g*A,(g+1)*A) of xp @ w_bd are the
    # logits of logical row pack*i + g.
    w_bd = jnp.zeros((EP, AP), dtype=w.dtype)
    for g in range(pack):
        w_bd = w_bd.at[g * E:(g + 1) * E, g * A:(g + 1) * A].set(w)
    b_tiled = jnp.tile(b_row, (1, pack))                                   # (1, AP)
    g_mat = jnp.kron(jnp.eye(pack, dtype=jnp.float32),
                     jnp.ones((A, A), dtype=jnp.float32))                  # (AP, AP)

    itemsize = jnp.dtype(xp.dtype).itemsize
    ep_pad = _round_up(EP, _LANES)
    ap_pad = _round_up(AP, _LANES)
    per_row = (2 * ep_pad * itemsize       # double-buffered x tile
               + 2 * ap_pad * 4            # double-buffered output tile
               + 3 * ap_pad * 4)           # logits / e / probs intermediates
    resident = 2 * (ep_pad * ap_pad + ap_pad * ap_pad + _SUBLANES * ap_pad) * 4

    tbp = _pick_tile(BP, max(1, block_b // pack), per_row, resident)
    grid = pl.cdiv(BP, tbp)
    vmem_limit = _vmem_limit(per_row, resident, tbp)

    kernel = functools.partial(_packed_kernel, exact_div=exact_div)
    out_p = pl.pallas_call(
        kernel,
        out_shape=jax.ShapeDtypeStruct((BP, AP), jnp.float32),
        grid=(grid,),
        in_specs=[
            pl.BlockSpec((tbp, EP), lambda i: (i, 0)),   # batch-tiled, lane-dense x
            pl.BlockSpec((EP, AP), lambda i: (0, 0)),    # resident block-diag weight
            pl.BlockSpec((1, AP), lambda i: (0, 0)),     # resident tiled bias
            pl.BlockSpec((AP, AP), lambda i: (0, 0)),    # resident group-sum matrix
        ],
        out_specs=pl.BlockSpec((tbp, AP), lambda i: (i, 0)),
        compiler_params=pltpu.CompilerParams(
            dimension_semantics=("parallel",),
            vmem_limit_bytes=vmem_limit,
        ),
        cost_estimate=pl.CostEstimate(
            flops=2 * BP * EP * AP + 2 * BP * AP * AP,
            transcendentals=BP * AP,
            bytes_accessed=itemsize * (BP * EP + EP * AP)
            + 4 * (AP * AP + AP + BP * AP),
        ),
    )(xp, w_bd, b_tiled, g_mat)

    # Free, contiguous reshape back to the module's (B, A) layout.
    return out_p.reshape(B, A)


def _forward_rowwise(x, w, b_row, *, block_b, exact_div):
    B, E = x.shape
    A = w.shape[1]
    itemsize = jnp.dtype(x.dtype).itemsize
    e_pad = _round_up(E, _LANES)
    a_pad = _round_up(A, _LANES)
    per_row = 2 * e_pad * itemsize + 2 * a_pad * 4 + 3 * a_pad * 4
    resident = 2 * (_round_up(E, _SUBLANES) * a_pad + _SUBLANES * a_pad) * itemsize

    tb = _pick_tile(B, block_b, per_row, resident)
    grid = pl.cdiv(B, tb)
    vmem_limit = _vmem_limit(per_row, resident, tb)

    kernel = functools.partial(_rowwise_kernel, exact_div=exact_div)
    return pl.pallas_call(
        kernel,
        out_shape=jax.ShapeDtypeStruct((B, A), jnp.float32),
        grid=(grid,),
        in_specs=[
            pl.BlockSpec((tb, E), lambda i: (i, 0)),     # batch-tiled x
            pl.BlockSpec((E, A), lambda i: (0, 0)),      # resident weight
            pl.BlockSpec((1, A), lambda i: (0, 0)),      # resident bias
        ],
        out_specs=pl.BlockSpec((tb, A), lambda i: (i, 0)),
        compiler_params=pltpu.CompilerParams(
            dimension_semantics=("parallel",),
            vmem_limit_bytes=vmem_limit,
        ),
        cost_estimate=pl.CostEstimate(
            flops=2 * B * E * A,
            transcendentals=B * A,
            bytes_accessed=itemsize * (B * E + E * A) + 4 * (A + B * A),
        ),
    )(x, w, b_row)


def antibiotic_forward(x, w, b, *, block_b=8192, exact_div=True):
    """softmax(x @ w + b, axis=1).  x:(B,E), w:(E,A) (= Linear weight.T), b:(A,)."""
    B, E = x.shape
    assert w.shape[0] == E
    A = w.shape[1]
    b_row = b.reshape(1, A).astype(jnp.float32)

    pack = _pack_factor(B, E, A)
    if pack > 1:
        return _forward_packed(x, w, b_row, pack=pack,
                               block_b=block_b, exact_div=exact_div)
    return _forward_rowwise(x, w, b_row, block_b=block_b, exact_div=exact_div)


if __name__ == "__main__":
    # Small shapes implied by the module: x is (batch, expert_dim),
    # fc maps expert_dim -> anti_label.
    batch, expert_dim, anti_label = 8, 32, 16

    key = jax.random.PRNGKey(0)
    kx, kw, kb = jax.random.split(key, 3)

    x = jax.random.normal(kx, (batch, expert_dim), dtype=jnp.float32)

    # nn.Linear-style init: U(-1/sqrt(in_features), 1/sqrt(in_features)).
    # PyTorch keeps weight as (anti_label, expert_dim); kernel uses its
    # transpose (expert_dim, anti_label) for the x @ W layout.
    bound = expert_dim ** -0.5
    w = jax.random.uniform(kw, (expert_dim, anti_label), jnp.float32, -bound, bound)
    b = jax.random.uniform(kb, (anti_label,), jnp.float32, -bound, bound)

    out = jax.block_until_ready(antibiotic_forward(x, w, b))
    ref = jax.nn.softmax(x @ w + b, axis=1)
    assert out.shape == (batch, anti_label)
    assert jnp.allclose(out, ref, atol=2e-3, rtol=2e-3)
    assert jnp.allclose(jnp.sum(out, axis=1), 1.0, atol=2e-3)

    # Larger batches with a small tile: exercise the multi-step pipelined grid,
    # the masked boundary block, and both code paths (packed / row-wise).
    for big_b, blk in ((2600, 512), (2501, 512)):   # 2600 -> packed, 2501 -> fallback
        xb = jax.random.normal(jax.random.PRNGKey(1), (big_b, expert_dim), jnp.float32)
        ob = jax.block_until_ready(antibiotic_forward(xb, w, b, block_b=blk))
        rb = jax.nn.softmax(xb @ w + b, axis=1)
        assert ob.shape == (big_b, anti_label)
        assert jnp.allclose(ob, rb, atol=2e-3, rtol=2e-3)
        assert jnp.allclose(jnp.sum(ob, axis=1), 1.0, atol=2e-3)

    print("KERNEL_OK")
</pallas_src>

<mosaic_0001>
module attributes {stable_mosaic.version = 11 : i64} {
  func.func @_packed_kernel(%arg0: i32, %arg1: memref<1x256xf32, #tpu.memory_space<vmem>>, %arg2: memref<256x128xf32, #tpu.memory_space<vmem>>, %arg3: memref<1x128xf32, #tpu.memory_space<vmem>>, %arg4: memref<128x128xf32, #tpu.memory_space<vmem>>, %arg5: memref<1x128xf32, #tpu.memory_space<vmem>>) attributes {dimension_semantics = [#tpu.dimension_semantics<parallel>], iteration_bounds = array<i64: 1>, scalar_prefetch = 0 : i64, scratch_operands = 0 : i64, tpu.core_type = #tpu.core_type<tc>, window_params = [{transform_indices = @transform_0, window_bounds = array<i64: 1, 256>}, {pipeline_mode = #tpu.pipeline_mode<synchronous>, transform_indices = @transform_1, window_bounds = array<i64: 256, 128>}, {pipeline_mode = #tpu.pipeline_mode<synchronous>, transform_indices = @transform_2, window_bounds = array<i64: 1, 128>}, {pipeline_mode = #tpu.pipeline_mode<synchronous>, transform_indices = @transform_3, window_bounds = array<i64: 128, 128>}, {transform_indices = @transform_4, window_bounds = array<i64: 1, 128>}]} {
    %c0 = arith.constant 0 : index
    %c0_0 = arith.constant 0 : index
    %0 = vector.load %arg1[%c0, %c0_0] : memref<1x256xf32, #tpu.memory_space<vmem>>, vector<1x256xf32>
    %c0_1 = arith.constant 0 : index
    %c0_2 = arith.constant 0 : index
    %1 = vector.load %arg2[%c0_1, %c0_2] : memref<256x128xf32, #tpu.memory_space<vmem>>, vector<256x128xf32>
    %cst = arith.constant dense<0.000000e+00> : vector<1x128xf32>
    %2 = tpu.matmul %0, %1, %cst {dimension_numbers = #tpu.dot_dimension_numbers<[1], [0], [0], [1], [0, 0, 1, 1], [], []>} : vector<1x256xf32>, vector<256x128xf32>, vector<1x128xf32> -> vector<1x128xf32>
    %c0_3 = arith.constant 0 : index
    %c0_4 = arith.constant 0 : index
    %3 = vector.load %arg3[%c0_3, %c0_4] : memref<1x128xf32, #tpu.memory_space<vmem>>, vector<1x128xf32>
    %4 = arith.addf %2, %3 : vector<1x128xf32>
    %cst_5 = arith.constant dense<0xFF800000> : vector<1xf32>
    %5 = vector.multi_reduction <maximumf>, %4, %cst_5 [1] : vector<1x128xf32> to vector<1xf32>
    %6 = vector.shape_cast %5 : vector<1xf32> to vector<1x1xf32>
    %7 = vector.broadcast %6 : vector<1x1xf32> to vector<1x128xf32>
    %8 = arith.subf %4, %7 : vector<1x128xf32>
    %9 = math.exp %8 : vector<1x128xf32>
    %c0_6 = arith.constant 0 : index
    %c0_7 = arith.constant 0 : index
    %10 = vector.load %arg4[%c0_6, %c0_7] : memref<128x128xf32, #tpu.memory_space<vmem>>, vector<128x128xf32>
    %cst_8 = arith.constant dense<0.000000e+00> : vector<1x128xf32>
    %11 = tpu.matmul %9, %10, %cst_8 {dimension_numbers = #tpu.dot_dimension_numbers<[1], [0], [0], [1], [0, 0, 1, 1], [], []>} : vector<1x128xf32>, vector<128x128xf32>, vector<1x128xf32> -> vector<1x128xf32>
    %cst_9 = arith.constant 1.000000e-30 : f32
    %12 = vector.broadcast %cst_9 : f32 to vector<1x128xf32>
    %13 = arith.maximumf %11, %12 : vector<1x128xf32>
    %14 = arith.divf %9, %13 : vector<1x128xf32>
    %c0_10 = arith.constant 0 : index
    %c0_11 = arith.constant 0 : index
    %15 = vector.load %arg5[%c0_10, %c0_11] : memref<1x128xf32, #tpu.memory_space<vmem>>, vector<1x128xf32>
    tpu.vector_store %arg5[%c0_10, %c0_11], %14 {strides = array<i32>} : memref<1x128xf32, #tpu.memory_space<vmem>>, vector<1x128xf32>,
    return
  }
  func.func @transform_0(%arg0: i32) -> (i32, i32) {
    %c0_i32 = arith.constant 0 : i32
    %c0_i32_0 = arith.constant 0 : i32
    return %arg0, %c0_i32 : i32, i32
  }
  func.func @transform_1(%arg0: i32) -> (i32, i32) {
    %c0_i32 = arith.constant 0 : i32
    %c0_i32_0 = arith.constant 0 : i32
    %c0_i32_1 = arith.constant 0 : i32
    return %c0_i32, %c0_i32_0 : i32, i32
  }
  func.func @transform_2(%arg0: i32) -> (i32, i32) {
    %c0_i32 = arith.constant 0 : i32
    %c0_i32_0 = arith.constant 0 : i32
    %c0_i32_1 = arith.constant 0 : i32
    return %c0_i32, %c0_i32_0 : i32, i32
  }
  func.func @transform_3(%arg0: i32) -> (i32, i32) {
    %c0_i32 = arith.constant 0 : i32
    %c0_i32_0 = arith.constant 0 : i32
    %c0_i32_1 = arith.constant 0 : i32
    return %c0_i32, %c0_i32_0 : i32, i32
  }
  func.func @transform_4(%arg0: i32) -> (i32, i32) {
    %c0_i32 = arith.constant 0 : i32
    %c0_i32_0 = arith.constant 0 : i32
    return %arg0, %c0_i32 : i32, i32
  }
}

</mosaic_0001>

<llo_original>
// kernel: tpu_custom_call.1
$region0: #{tpu_custom_call.1}
  #allocation0 [shape = 'u32[]', space=smem, size = 0x4, offset = 0x4, fixed_abs, tag = 'smem constant byte address 0x4 - core index']
  #allocation1 [shape = 'u32[144,128]{1,0:T(1,128)}', space=vmem, size = 0x12000, scoped, tag = 'internal scratch']
  %s0 = inlined_call_operand.hbm [shape: f32[1,256], index: 0, kind: input, shape index: {}]
  %s1 = inlined_call_operand.hbm [shape: f32[256,128], index: 1, kind: input, shape index: {}]
  %s2 = inlined_call_operand.vmem [shape: f32[1,128], index: 2, kind: input, shape index: {}]
  %s3 = inlined_call_operand.hbm [shape: f32[128,128], index: 3, kind: input, shape index: {}]
  %s4 = inlined_call_operand.hbm [shape: f32[1,128], index: 4, kind: output, shape index: {}]
  %s5 = sld [smem:[#allocation0]]
  $region38: #{tpu_custom_call.1} parent=0
    _
  %s7 = ssub.s32 1, %s5
  %s8 = scalar_select 0, %s7, %s5
  $region1: #{tpu_custom_call.1} parent=0
    #allocation2 [shape = 'u8[1024]{0}', space=vmem, size = 0x400, scoped, tag = 'input window, operand 0, single buffered']
    #allocation3 [shape = 's32[1]{0}', space=sflag, size = 0x4, scoped, tag = 'scoped memory for tpu_custom_call.1']
    #allocation4 [shape = 's32[1]{0}', space=sflag, size = 0x4, scoped, tag = 'scoped memory for tpu_custom_call.1']
    #allocation5 [shape = 'u8[131072]{0}', space=vmem, size = 0x20000, scoped, tag = 'input window, operand 1, single buffered']
    #allocation6 [shape = 's32[1]{0}', space=sflag, size = 0x4, scoped, tag = 'scoped memory for tpu_custom_call.1']
    #allocation7 [shape = 'u8[65536]{0}', space=vmem, size = 0x10000, scoped, tag = 'input window, operand 3, single buffered']
    #allocation8 [shape = 'u8[512]{0}', space=vmem, size = 0x400, scoped, tag = 'output window, operand 0, single buffered']
    %9 = vsyncpa [#allocation3], 0
    %10 = vsyncpa [#allocation6], 0
    %11 = vsyncpa [#allocation4], 0
    // Predicated region
    $region2: #{tpu_custom_call.1} parent=1 // pred_check
      _
    $region3: #{tpu_custom_call.1} parent=1 // pred_check_branch
      %13 = sbr.rel (0) target = $region5
    $region4: #{tpu_custom_call.1} parent=1 // pred_region
      %s15 = ssub.s32 32, 32
      %16 = vsyncadd [#allocation3], %s15
      %s18 = sshll.u32 [#allocation2], 4
      %s19 = int_to_ptr.vmem [resolvable:$true] %s18
      %21 = dma.hbm_to_vmem [thread:$0]  %s0, 32, %s19, [#allocation3]
    $region5: #{tpu_custom_call.1} parent=1 // pred_fallthru
      _
    // Predicated region
    $region6: #{tpu_custom_call.1} parent=1 // pred_check
      _
    $region7: #{tpu_custom_call.1} parent=1 // pred_check_branch
      %23 = sbr.rel (0) target = $region9
    $region8: #{tpu_custom_call.1} parent=1 // pred_region
      %s25 = ssub.s32 4096, 4096
      %26 = vsyncadd [#allocation6], %s25
      %s27 = sshll.u32 [#allocation5], 4
      %s28 = int_to_ptr.vmem [resolvable:$true] %s27
      %33 = dma.hbm_to_vmem [thread:$0]  %s1, 4096, %s28, [#allocation6], 128, 128, 8
    $region9: #{tpu_custom_call.1} parent=1 // pred_fallthru
      _
    // Predicated region
    $region10: #{tpu_custom_call.1} parent=1 // pred_check
      _
    $region11: #{tpu_custom_call.1} parent=1 // pred_check_branch
      %35 = sbr.rel (0) target = $region13
    $region12: #{tpu_custom_call.1} parent=1 // pred_region
      _
    $region13: #{tpu_custom_call.1} parent=1 // pred_fallthru
      _
    // Predicated region
    $region14: #{tpu_custom_call.1} parent=1 // pred_check
      _
    $region15: #{tpu_custom_call.1} parent=1 // pred_check_branch
      %37 = sbr.rel (0) target = $region17
    $region16: #{tpu_custom_call.1} parent=1 // pred_region
      %s39 = ssub.s32 2048, 2048
      %40 = vsyncadd [#allocation6], %s39
      %s41 = sshll.u32 [#allocation7], 4
      %s42 = int_to_ptr.vmem [resolvable:$true] %s41
      %47 = dma.hbm_to_vmem [thread:$0]  %s3, 2048, %s42, [#allocation6], 128, 128, 8
    $region17: #{tpu_custom_call.1} parent=1 // pred_fallthru
      _
    // Predicated region
    $region18: #{tpu_custom_call.1} parent=1 // pred_check
      _
    $region19: #{tpu_custom_call.1} parent=1 // pred_check_branch
      %49 = sbr.rel (0) target = $region21
    $region20: #{tpu_custom_call.1} parent=1 // pred_region
      %50 = dma.done [#allocation3], 32
    $region21: #{tpu_custom_call.1} parent=1 // pred_fallthru
      _
    // Predicated region
    $region22: #{tpu_custom_call.1} parent=1 // pred_check
      _
    $region23: #{tpu_custom_call.1} parent=1 // pred_check_branch
      %52 = sbr.rel (0) target = $region25
    $region24: #{tpu_custom_call.1} parent=1 // pred_region
      %53 = dma.done [#allocation6], 4096
    $region25: #{tpu_custom_call.1} parent=1 // pred_fallthru
      _
    // Predicated region
    $region26: #{tpu_custom_call.1} parent=1 // pred_check
      _
    $region27: #{tpu_custom_call.1} parent=1 // pred_check_branch
      %55 = sbr.rel (0) target = $region29
    $region28: #{tpu_custom_call.1} parent=1 // pred_region
      %56 = dma.done [#allocation6], 2048
    $region29: #{tpu_custom_call.1} parent=1 // pred_fallthru
      _
    %v57 = vld [vmem:[#allocation2] sm:$0x3]
    %v58 = vld [vmem:[#allocation5] sm:$0xff]
    %v59 = vld [vmem:[#allocation5 + $0x8] sm:$0xff]
    %v60 = vld [vmem:[#allocation5 + $0x10] sm:$0xff]
    %v61 = vld [vmem:[#allocation5 + $0x18] sm:$0xff]
    %v62 = vld [vmem:[#allocation5 + $0x20] sm:$0xff]
    %v63 = vld [vmem:[#allocation5 + $0x28] sm:$0xff]
    %v64 = vld [vmem:[#allocation5 + $0x30] sm:$0xff]
    %v65 = vld [vmem:[#allocation5 + $0x38] sm:$0xff]
    %v66 = vld [vmem:[#allocation5 + $0x40] sm:$0xff]
    %v67 = vld [vmem:[#allocation5 + $0x48] sm:$0xff]
    %v68 = vld [vmem:[#allocation5 + $0x50] sm:$0xff]
    %v69 = vld [vmem:[#allocation5 + $0x58] sm:$0xff]
    %v70 = vld [vmem:[#allocation5 + $0x60] sm:$0xff]
    %v71 = vld [vmem:[#allocation5 + $0x68] sm:$0xff]
    %v72 = vld [vmem:[#allocation5 + $0x70] sm:$0xff]
    %v73 = vld [vmem:[#allocation5 + $0x78] sm:$0xff]
    %v74 = vld [vmem:[#allocation5 + $0x80] sm:$0xff]
    %v75 = vld [vmem:[#allocation5 + $0x88] sm:$0xff]
    %v76 = vld [vmem:[#allocation5 + $0x90] sm:$0xff]
    %v77 = vld [vmem:[#allocation5 + $0x98] sm:$0xff]
    %v78 = vld [vmem:[#allocation5 + $0xa0] sm:$0xff]
    %v79 = vld [vmem:[#allocation5 + $0xa8] sm:$0xff]
    %v80 = vld [vmem:[#allocation5 + $0xb0] sm:$0xff]
    %v81 = vld [vmem:[#allocation5 + $0xb8] sm:$0xff]
    %v82 = vld [vmem:[#allocation5 + $0xc0] sm:$0xff]
    %v83 = vld [vmem:[#allocation5 + $0xc8] sm:$0xff]
    %v84 = vld [vmem:[#allocation5 + $0xd0] sm:$0xff]
    %v85 = vld [vmem:[#allocation5 + $0xd8] sm:$0xff]
    %v86 = vld [vmem:[#allocation5 + $0xe0] sm:$0xff]
    %v87 = vld [vmem:[#allocation5 + $0xe8] sm:$0xff]
    %v88 = vld [vmem:[#allocation5 + $0xf0] sm:$0xff]
    %v89 = vld [vmem:[#allocation5 + $0xf8] sm:$0xff]
    %v90 = vld [vmem:[%s2] sm:$0x1]
    %v92 = vlaneseq
    %v93 = vshrl.u32 %v92, 7
    %v94 = vsub.s32 0, %v93
    %v95 = vrot.slane %v57, %v94
    %v96 = vlaneseq
    %v97 = vshrl.u32 %v96, 7
    %v98 = vsub.s32 1, %v97
    %v99 = vrot.slane %v57, %v98
    %102 = vmatprep.subr.mxu0 0.0
    %103 = vmatpush1.msra.mxu0 %v58
    %104 = vmatprep.subr.mxu0 0.0
    %105 = vmatpush1.msra.mxu0 %v59
    %106 = vmatprep.subr.mxu0 0.0
    %107 = vmatpush1.msra.mxu0 %v60
    %108 = vmatprep.subr.mxu0 0.0
    %109 = vmatpush1.msra.mxu0 %v61
    %110 = vmatprep.subr.mxu0 0.0
    %111 = vmatpush1.msra.mxu0 %v62
    %112 = vmatprep.subr.mxu0 0.0
    %113 = vmatpush1.msra.mxu0 %v63
    %114 = vmatprep.subr.mxu0 0.0
    %115 = vmatpush1.msra.mxu0 %v64
    %116 = vmatprep.subr.mxu0 0.0
    %117 = vmatpush1.msra.mxu0 %v65
    %118 = vmatprep.subr.mxu0 0.0
    %119 = vmatpush1.msra.mxu0 %v66
    %120 = vmatprep.subr.mxu0 0.0
    %121 = vmatpush1.msra.mxu0 %v67
    %122 = vmatprep.subr.mxu0 0.0
    %123 = vmatpush1.msra.mxu0 %v68
    %124 = vmatprep.subr.mxu0 0.0
    %125 = vmatpush1.msra.mxu0 %v69
    %126 = vmatprep.subr.mxu0 0.0
    %127 = vmatpush1.msra.mxu0 %v70
    %128 = vmatprep.subr.mxu0 0.0
    %129 = vmatpush1.msra.mxu0 %v71
    %130 = vmatprep.subr.mxu0 0.0
    %131 = vmatpush1.msra.mxu0 %v72
    %132 = vmatprep.subr.mxu0 0.0
    %133 = vmatpush1.msra.mxu0 %v73
    %134 = vmatprep.subr.mxu0 0.0
    %135 = vmatpush1.msra.mxu0 %v74
    %136 = vmatprep.subr.mxu0 0.0
    %137 = vmatpush1.msra.mxu0 %v75
    %138 = vmatprep.subr.mxu0 0.0
    %139 = vmatpush1.msra.mxu0 %v76
    %140 = vmatprep.subr.mxu0 0.0
    %141 = vmatpush1.msra.mxu0 %v77
    %142 = vmatprep.subr.mxu0 0.0
    %143 = vmatpush1.msra.mxu0 %v78
    %144 = vmatprep.subr.mxu0 0.0
    %145 = vmatpush1.msra.mxu0 %v79
    %146 = vmatprep.subr.mxu0 0.0
    %147 = vmatpush1.msra.mxu0 %v80
    %148 = vmatprep.subr.mxu0 0.0
    %149 = vmatpush1.msra.mxu0 %v81
    %150 = vmatprep.subr.mxu0 0.0
    %151 = vmatpush1.msra.mxu0 %v82
    %152 = vmatprep.subr.mxu0 0.0
    %153 = vmatpush1.msra.mxu0 %v83
    %154 = vmatprep.subr.mxu0 0.0
    %155 = vmatpush1.msra.mxu0 %v84
    %156 = vmatprep.subr.mxu0 0.0
    %157 = vmatpush1.msra.mxu0 %v85
    %158 = vmatprep.subr.mxu0 0.0
    %159 = vmatpush1.msra.mxu0 %v86
    %160 = vmatprep.subr.mxu0 0.0
    %161 = vmatpush1.msra.mxu0 %v87
    %162 = vmatprep.subr.mxu0 0.0
    %163 = vmatpush1.msra.mxu0 %v88
    %164 = vmatprep.subr.mxu0 0.0
    %165 = vmatpush1.msra.mxu0 %v89
    %166 = vmatprep.mubr.f32.mxu0 %v99
    %167 = vmatmul.mubr.f32.gmra.mrb[0].mxu0 %v95
    %v168 = vpop.f32.mrb[0].mxu0
    %v169 = vadd.f32 %v90, %v168
    %v170 = vpop.f32.mrb[0].mxu0
    %171 = vdwg.mxu0
    %vm172 = vcmask 1040384
    %v173 = vsel %vm172, %v169, -inf
    %174 = vmax.xlane.f32.xlu0 %v173
    %v175 = vpop.xlane.xlu0 %174
    %v176 = vsub.f32 %v169, %v175
    %v177 = vmul.f32 %v176, 1.442695
    %v178 = vpow.pop %v177
    %v179 = vld [vmem:[#allocation7] sm:$0xff]
    %v180 = vld [vmem:[#allocation7 + $0x8] sm:$0xff]
    %v181 = vld [vmem:[#allocation7 + $0x10] sm:$0xff]
    %v182 = vld [vmem:[#allocation7 + $0x18] sm:$0xff]
    %v183 = vld [vmem:[#allocation7 + $0x20] sm:$0xff]
    %v184 = vld [vmem:[#allocation7 + $0x28] sm:$0xff]
    %v185 = vld [vmem:[#allocation7 + $0x30] sm:$0xff]
    %v186 = vld [vmem:[#allocation7 + $0x38] sm:$0xff]
    %v187 = vld [vmem:[#allocation7 + $0x40] sm:$0xff]
    %v188 = vld [vmem:[#allocation7 + $0x48] sm:$0xff]
    %v189 = vld [vmem:[#allocation7 + $0x50] sm:$0xff]
    %v190 = vld [vmem:[#allocation7 + $0x58] sm:$0xff]
    %v191 = vld [vmem:[#allocation7 + $0x60] sm:$0xff]
    %v192 = vld [vmem:[#allocation7 + $0x68] sm:$0xff]
    %v193 = vld [vmem:[#allocation7 + $0x70] sm:$0xff]
    %v194 = vld [vmem:[#allocation7 + $0x78] sm:$0xff]
    %195 = vmatprep.subr.mxu0 0.0
    %196 = vmatpush1.msra.mxu0 %v179
    %197 = vmatprep.subr.mxu0 0.0
    %198 = vmatpush1.msra.mxu0 %v180
    %199 = vmatprep.subr.mxu0 0.0
    %200 = vmatpush1.msra.mxu0 %v181
    %201 = vmatprep.subr.mxu0 0.0
    %202 = vmatpush1.msra.mxu0 %v182
    %203 = vmatprep.subr.mxu0 0.0
    %204 = vmatpush1.msra.mxu0 %v183
    %205 = vmatprep.subr.mxu0 0.0
    %206 = vmatpush1.msra.mxu0 %v184
    %207 = vmatprep.subr.mxu0 0.0
    %208 = vmatpush1.msra.mxu0 %v185
    %209 = vmatprep.subr.mxu0 0.0
    %210 = vmatpush1.msra.mxu0 %v186
    %211 = vmatprep.subr.mxu0 0.0
    %212 = vmatpush1.msra.mxu0 %v187
    %213 = vmatprep.subr.mxu0 0.0
    %214 = vmatpush1.msra.mxu0 %v188
    %215 = vmatprep.subr.mxu0 0.0
    %216 = vmatpush1.msra.mxu0 %v189
    %217 = vmatprep.subr.mxu0 0.0
    %218 = vmatpush1.msra.mxu0 %v190
    %219 = vmatprep.subr.mxu0 0.0
    %220 = vmatpush1.msra.mxu0 %v191
    %221 = vmatprep.subr.mxu0 0.0
    %222 = vmatpush1.msra.mxu0 %v192
    %223 = vmatprep.subr.mxu0 0.0
    %224 = vmatpush1.msra.mxu0 %v193
    %225 = vmatprep.subr.mxu0 0.0
    %226 = vmatpush1.msra.mxu0 %v194
    %227 = vmatprep.subr.mxu0 0.0
    %228 = vmatpush1.msra.mxu0 0.0
    %229 = vmatprep.subr.mxu0 0.0
    %230 = vmatpush1.msra.mxu0 0.0
    %231 = vmatprep.subr.mxu0 0.0
    %232 = vmatpush1.msra.mxu0 0.0
    %233 = vmatprep.subr.mxu0 0.0
    %234 = vmatpush1.msra.mxu0 0.0
    %235 = vmatprep.subr.mxu0 0.0
    %236 = vmatpush1.msra.mxu0 0.0
    %237 = vmatprep.subr.mxu0 0.0
    %238 = vmatpush1.msra.mxu0 0.0
    %239 = vmatprep.subr.mxu0 0.0
    %240 = vmatpush1.msra.mxu0 0.0
    %241 = vmatprep.subr.mxu0 0.0
    %242 = vmatpush1.msra.mxu0 0.0
    %243 = vmatprep.subr.mxu0 0.0
    %244 = vmatpush1.msra.mxu0 0.0
    %245 = vmatprep.subr.mxu0 0.0
    %246 = vmatpush1.msra.mxu0 0.0
    %247 = vmatprep.subr.mxu0 0.0
    %248 = vmatpush1.msra.mxu0 0.0
    %249 = vmatprep.subr.mxu0 0.0
    %250 = vmatpush1.msra.mxu0 0.0
    %251 = vmatprep.subr.mxu0 0.0
    %252 = vmatpush1.msra.mxu0 0.0
    %253 = vmatprep.subr.mxu0 0.0
    %254 = vmatpush1.msra.mxu0 0.0
    %255 = vmatprep.subr.mxu0 0.0
    %256 = vmatpush1.msra.mxu0 0.0
    %257 = vmatprep.subr.mxu0 0.0
    %258 = vmatpush1.msra.mxu0 0.0
    %259 = vmatprep.mubr.f32.mxu0 0.0
    %260 = vmatmul.mubr.f32.gmra.mrb[0].mxu0 %v178
    %v261 = vpop.f32.mrb[0].mxu0
    %v262 = vadd.f32 0.0, %v261
    %v263 = vpop.f32.mrb[0].mxu0
    %264 = vdwg.mxu0
    %v265 = vmax.f32 %v262, 1e-30
    %v266 = vrcp.pop %v265
    %v267 = vmul.f32 %v178, %v266
    %268 = vst [vmem:[#allocation8] sm:$0x1] %v267
    // Predicated region
    $region30: #{tpu_custom_call.1} parent=1 // pred_check
      _
    $region31: #{tpu_custom_call.1} parent=1 // pred_check_branch
      %270 = sbr.rel (0) target = $region33
    $region32: #{tpu_custom_call.1} parent=1 // pred_region
      %s272 = ssub.s32 16, 16
      %273 = vsyncadd [#allocation4], %s272
      %s275 = sshll.u32 [#allocation8], 4
      %s276 = int_to_ptr.vmem [resolvable:$true] %s275
      %278 = dma.vmem_to_hbm [thread:$0]  %s276, 16, %s4, [#allocation4]
    $region33: #{tpu_custom_call.1} parent=1 // pred_fallthru
      _
    // Predicated region
    $region34: #{tpu_custom_call.1} parent=1 // pred_check
      _
    $region35: #{tpu_custom_call.1} parent=1 // pred_check_branch
      %280 = sbr.rel (0) target = $region37
    $region36: #{tpu_custom_call.1} parent=1 // pred_region
      %281 = dma.done [#allocation4], 16
    $region37: #{tpu_custom_call.1} parent=1 // pred_fallthru
      _
    %282 = vsyncpa [#allocation3], 1
    %283 = vsyncpa [#allocation6], 1
    %284 = vsyncpa [#allocation4], 1

</llo_original>
